<compile_context>
chip_gen: v5e
topology: v5e:2x2
jax: 0.10.0
libtpu: 0.0.40
codegen_flags: <defaults>
</compile_context>

<pallas_src>
import functools

import jax
import jax.numpy as jnp
from jax.experimental import pallas as pl
from jax.experimental.pallas import tpu as pltpu


LANE = 128        # TPU lane width: keep last dims multiples of this
MAX_TILE_B = 512  # cap on batch rows per grid step (amortizes ~0.35us/step)


def _round_up(n, m):
    return ((n + m - 1) // m) * m


def _pad_to(a, shape):
    pads = [(0, s - d) for d, s in zip(a.shape, shape)]
    return jnp.pad(a, pads)


def _choose_tile_b(batch):
    """Adaptive batch tile: small batches -> one tight tile; big batches ->
    >=2 grid steps (v7x megacore) capped at MAX_TILE_B rows."""
    b16 = _round_up(max(batch, 1), 16)   # 16 = bf16 sublane packing
    if b16 <= 256:
        return b16                       # single small tile; <=15 padded rows
    half = _round_up((b16 + 1) // 2, 16)
    return min(half, MAX_TILE_B)


def _mlp_kernel(x_ref,
                w1_ref, b1_ref,
                w2_ref, b2_ref,
                w3_ref, b3_ref,
                w4_ref, b4_ref,
                o_ref, *, out_size):
    # x arrives as f32; cast to bf16 here (VPU has slack under the MXU) so the
    # wrapper doesn't need a separate pad+convert XLA pass over the batch.
    xb = x_ref[...].astype(jnp.bfloat16)

    # --- fc1 + ReLU ---  (bf16 MXU operands, f32 accumulation)
    h = jnp.dot(xb, w1_ref[...], preferred_element_type=jnp.float32)
    h = jnp.maximum(h + b1_ref[...], 0.0)
    # --- fc2 + ReLU ---
    h = jnp.dot(h.astype(jnp.bfloat16), w2_ref[...],
                preferred_element_type=jnp.float32)
    h = jnp.maximum(h + b2_ref[...], 0.0)
    # --- fc3 + ReLU ---
    h = jnp.dot(h.astype(jnp.bfloat16), w3_ref[...],
                preferred_element_type=jnp.float32)
    h = jnp.maximum(h + b3_ref[...], 0.0)
    # --- fc4 ---
    logits = jnp.dot(h.astype(jnp.bfloat16), w4_ref[...],
                     preferred_element_type=jnp.float32)
    logits = logits + b4_ref[...]

    # --- log_softmax over the REAL output columns only (lanes are padded) ---
    col = jax.lax.broadcasted_iota(jnp.int32, logits.shape, 1)
    valid = col < out_size
    logits = jnp.where(valid, logits, jnp.float32(-1e30))
    m = jnp.max(logits, axis=1, keepdims=True)
    shifted = logits - m
    sumexp = jnp.sum(jnp.where(valid, jnp.exp(shifted), 0.0),
                     axis=1, keepdims=True)
    lse = jnp.log(sumexp)
    # Lane-dense (tile_b, 128) bf16 store -> halves the HBM writeback stream;
    # the wrapper slices the first out_size columns and upcasts.
    o_ref[...] = (shifted - lse).astype(o_ref.dtype)


def prepare_params(params):
    """Pad weights/biases to lane-friendly shapes and cast MXU operands to
    bf16 ONCE (hoisted out of the per-call path)."""
    in_size, hidden = params["w1"].shape
    out_size = params["w4"].shape[1]
    in_pad = _round_up(in_size, LANE)
    h_pad = _round_up(hidden, LANE)      # 64 -> 128
    out_pad = _round_up(out_size, LANE)  # 10 -> 128
    return {
        "w1": _pad_to(params["w1"], (in_pad, h_pad)).astype(jnp.bfloat16),
        "b1": _pad_to(params["b1"], (1, h_pad)).astype(jnp.float32),
        "w2": _pad_to(params["w2"], (h_pad, h_pad)).astype(jnp.bfloat16),
        "b2": _pad_to(params["b2"], (1, h_pad)).astype(jnp.float32),
        "w3": _pad_to(params["w3"], (h_pad, h_pad)).astype(jnp.bfloat16),
        "b3": _pad_to(params["b3"], (1, h_pad)).astype(jnp.float32),
        "w4": _pad_to(params["w4"], (h_pad, out_pad)).astype(jnp.bfloat16),
        "b4": _pad_to(params["b4"], (1, out_pad)).astype(jnp.float32),
    }


@functools.partial(jax.jit, static_argnums=(2,))
def net_forward(x, prepared, out_size):
    """x: (B, input_size) float32.  prepared: output of prepare_params()."""
    B, in_size = x.shape
    in_pad, h_pad = prepared["w1"].shape
    out_pad = prepared["w4"].shape[1]

    tile_b = _choose_tile_b(B)
    b_pad = _round_up(B, tile_b)

    # Keep x in f32 (bf16 cast happens inside the kernel); pad only if needed.
    xp = x
    if B != b_pad or in_size != in_pad:
        xp = jnp.pad(x, ((0, b_pad - B), (0, in_pad - in_size)))

    grid = (b_pad // tile_b,)
    kernel = functools.partial(_mlp_kernel, out_size=out_size)

    # Weights/biases use constant index_maps -> resident in VMEM across the
    # whole batch grid; only x / out tiles stream (double-buffered by Pallas).
    out_padded = pl.pallas_call(
        kernel,
        out_shape=jax.ShapeDtypeStruct((b_pad, out_pad), jnp.bfloat16),
        grid=grid,
        in_specs=[
            pl.BlockSpec((tile_b, in_pad), lambda i: (i, 0)),   # x tile (f32)
            pl.BlockSpec((in_pad, h_pad), lambda i: (0, 0)),    # w1 (resident)
            pl.BlockSpec((1, h_pad), lambda i: (0, 0)),         # b1
            pl.BlockSpec((h_pad, h_pad), lambda i: (0, 0)),     # w2
            pl.BlockSpec((1, h_pad), lambda i: (0, 0)),         # b2
            pl.BlockSpec((h_pad, h_pad), lambda i: (0, 0)),     # w3
            pl.BlockSpec((1, h_pad), lambda i: (0, 0)),         # b3
            pl.BlockSpec((h_pad, out_pad), lambda i: (0, 0)),   # w4
            pl.BlockSpec((1, out_pad), lambda i: (0, 0)),       # b4
        ],
        out_specs=pl.BlockSpec((tile_b, out_pad), lambda i: (i, 0)),
        compiler_params=pltpu.CompilerParams(
            dimension_semantics=("parallel",),     # shards batch on v7x's 2 TCs
            vmem_limit_bytes=32 * 1024 * 1024,     # portable to v7x scoped VMEM
        ),
    )(xp, prepared["w1"], prepared["b1"], prepared["w2"], prepared["b2"],
      prepared["w3"], prepared["b3"], prepared["w4"], prepared["b4"])

    return out_padded[:B, :out_size].astype(jnp.float32)


def init_params(key, input_size, output_size, hidden=64):
    """Deterministic synthetic parameters (PyTorch-like uniform fan-in init)."""
    def linear(k, fan_in, fan_out):
        kw, kb = jax.random.split(k)
        bound = 1.0 / jnp.sqrt(fan_in)
        # stored as (in, out) so the kernel computes x @ W + b
        w = jax.random.uniform(kw, (fan_in, fan_out), jnp.float32, -bound, bound)
        b = jax.random.uniform(kb, (1, fan_out), jnp.float32, -bound, bound)
        return w, b

    k1, k2, k3, k4 = jax.random.split(key, 4)
    w1, b1 = linear(k1, input_size, hidden)
    w2, b2 = linear(k2, hidden, hidden)
    w3, b3 = linear(k3, hidden, hidden)
    w4, b4 = linear(k4, hidden, output_size)
    return {"w1": w1, "b1": b1, "w2": w2, "b2": b2,
            "w3": w3, "b3": b3, "w4": w4, "b4": b4}


def _reference(x, params):
    """Pure-JAX reference with the same bf16-MXU / f32-accumulate recipe."""
    def lin(h, w, b):
        return jnp.dot(h.astype(jnp.bfloat16), w.astype(jnp.bfloat16),
                       preferred_element_type=jnp.float32) + b
    h = jnp.maximum(lin(x, params["w1"], params["b1"]), 0.0)
    h = jnp.maximum(lin(h, params["w2"], params["b2"]), 0.0)
    h = jnp.maximum(lin(h, params["w3"], params["b3"]), 0.0)
    logits = lin(h, params["w4"], params["b4"])
    return jax.nn.log_softmax(logits, axis=1)


if __name__ == "__main__":
    INPUT_SIZE = 128   # small stand-in for e.g. 784 MNIST pixels
    OUTPUT_SIZE = 10   # 10 digit classes
    BATCH = 8

    key = jax.random.PRNGKey(0)
    kx, kp = jax.random.split(key)
    x = jax.random.normal(kx, (BATCH, INPUT_SIZE), dtype=jnp.float32)
    params = init_params(kp, INPUT_SIZE, OUTPUT_SIZE)
    prepared = prepare_params(params)          # pad/cast once, not per call

    out = net_forward(x, prepared, OUTPUT_SIZE)
    out = jax.block_until_ready(out)

    assert out.shape == (BATCH, OUTPUT_SIZE)
    # sanity: log_softmax rows must (approximately) exp-sum to 1
    # (output is stored in bf16 -> ~0.5% tolerance on the row sums)
    row_sums = jnp.exp(out).sum(axis=1)
    assert bool(jnp.allclose(row_sums, 1.0, atol=1e-2)), row_sums
    # loose numeric check against a pure-JAX reference (same bf16 recipe)
    ref = _reference(x, params)
    assert bool(jnp.allclose(out, ref, atol=2e-2, rtol=2e-2))

    print("KERNEL_OK")
</pallas_src>

<mosaic_0001>
module attributes {stable_mosaic.version = 11 : i64} {
  func.func @_mlp_kernel(%arg0: i32, %arg1: memref<16x128xf32, #tpu.memory_space<vmem>>, %arg2: memref<128x128xbf16, #tpu.memory_space<vmem>>, %arg3: memref<1x128xf32, #tpu.memory_space<vmem>>, %arg4: memref<128x128xbf16, #tpu.memory_space<vmem>>, %arg5: memref<1x128xf32, #tpu.memory_space<vmem>>, %arg6: memref<128x128xbf16, #tpu.memory_space<vmem>>, %arg7: memref<1x128xf32, #tpu.memory_space<vmem>>, %arg8: memref<128x128xbf16, #tpu.memory_space<vmem>>, %arg9: memref<1x128xf32, #tpu.memory_space<vmem>>, %arg10: memref<16x128xbf16, #tpu.memory_space<vmem>>) attributes {dimension_semantics = [#tpu.dimension_semantics<parallel>], iteration_bounds = array<i64: 1>, scalar_prefetch = 0 : i64, scratch_operands = 0 : i64, tpu.core_type = #tpu.core_type<tc>, window_params = [{transform_indices = @transform_0, window_bounds = array<i64: 16, 128>}, {pipeline_mode = #tpu.pipeline_mode<synchronous>, transform_indices = @transform_1, window_bounds = array<i64: 128, 128>}, {pipeline_mode = #tpu.pipeline_mode<synchronous>, transform_indices = @transform_2, window_bounds = array<i64: 1, 128>}, {pipeline_mode = #tpu.pipeline_mode<synchronous>, transform_indices = @transform_3, window_bounds = array<i64: 128, 128>}, {pipeline_mode = #tpu.pipeline_mode<synchronous>, transform_indices = @transform_4, window_bounds = array<i64: 1, 128>}, {pipeline_mode = #tpu.pipeline_mode<synchronous>, transform_indices = @transform_5, window_bounds = array<i64: 128, 128>}, {pipeline_mode = #tpu.pipeline_mode<synchronous>, transform_indices = @transform_6, window_bounds = array<i64: 1, 128>}, {pipeline_mode = #tpu.pipeline_mode<synchronous>, transform_indices = @transform_7, window_bounds = array<i64: 128, 128>}, {pipeline_mode = #tpu.pipeline_mode<synchronous>, transform_indices = @transform_8, window_bounds = array<i64: 1, 128>}, {transform_indices = @transform_9, window_bounds = array<i64: 16, 128>}]} {
    %c0 = arith.constant 0 : index
    %c0_0 = arith.constant 0 : index
    %0 = vector.load %arg1[%c0, %c0_0] : memref<16x128xf32, #tpu.memory_space<vmem>>, vector<16x128xf32>
    %1 = arith.truncf %0 : vector<16x128xf32> to vector<16x128xbf16>
    %c0_1 = arith.constant 0 : index
    %c0_2 = arith.constant 0 : index
    %2 = vector.load %arg2[%c0_1, %c0_2] : memref<128x128xbf16, #tpu.memory_space<vmem>>, vector<128x128xbf16>
    %cst = arith.constant dense<0.000000e+00> : vector<16x128xf32>
    %3 = tpu.matmul %1, %2, %cst {dimension_numbers = #tpu.dot_dimension_numbers<[1], [0], [0], [1], [0, 0, 1, 1], [], []>} : vector<16x128xbf16>, vector<128x128xbf16>, vector<16x128xf32> -> vector<16x128xf32>
    %c0_3 = arith.constant 0 : index
    %c0_4 = arith.constant 0 : index
    %4 = vector.load %arg3[%c0_3, %c0_4] : memref<1x128xf32, #tpu.memory_space<vmem>>, vector<1x128xf32>
    %5 = vector.broadcast %4 : vector<1x128xf32> to vector<16x128xf32>
    %6 = arith.addf %3, %5 : vector<16x128xf32>
    %cst_5 = arith.constant 0.000000e+00 : f32
    %7 = vector.broadcast %cst_5 : f32 to vector<16x128xf32>
    %8 = arith.maximumf %6, %7 : vector<16x128xf32>
    %9 = arith.truncf %8 : vector<16x128xf32> to vector<16x128xbf16>
    %c0_6 = arith.constant 0 : index
    %c0_7 = arith.constant 0 : index
    %10 = vector.load %arg4[%c0_6, %c0_7] : memref<128x128xbf16, #tpu.memory_space<vmem>>, vector<128x128xbf16>
    %cst_8 = arith.constant dense<0.000000e+00> : vector<16x128xf32>
    %11 = tpu.matmul %9, %10, %cst_8 {dimension_numbers = #tpu.dot_dimension_numbers<[1], [0], [0], [1], [0, 0, 1, 1], [], []>} : vector<16x128xbf16>, vector<128x128xbf16>, vector<16x128xf32> -> vector<16x128xf32>
    %c0_9 = arith.constant 0 : index
    %c0_10 = arith.constant 0 : index
    %12 = vector.load %arg5[%c0_9, %c0_10] : memref<1x128xf32, #tpu.memory_space<vmem>>, vector<1x128xf32>
    %13 = vector.broadcast %12 : vector<1x128xf32> to vector<16x128xf32>
    %14 = arith.addf %11, %13 : vector<16x128xf32>
    %cst_11 = arith.constant 0.000000e+00 : f32
    %15 = vector.broadcast %cst_11 : f32 to vector<16x128xf32>
    %16 = arith.maximumf %14, %15 : vector<16x128xf32>
    %17 = arith.truncf %16 : vector<16x128xf32> to vector<16x128xbf16>
    %c0_12 = arith.constant 0 : index
    %c0_13 = arith.constant 0 : index
    %18 = vector.load %arg6[%c0_12, %c0_13] : memref<128x128xbf16, #tpu.memory_space<vmem>>, vector<128x128xbf16>
    %cst_14 = arith.constant dense<0.000000e+00> : vector<16x128xf32>
    %19 = tpu.matmul %17, %18, %cst_14 {dimension_numbers = #tpu.dot_dimension_numbers<[1], [0], [0], [1], [0, 0, 1, 1], [], []>} : vector<16x128xbf16>, vector<128x128xbf16>, vector<16x128xf32> -> vector<16x128xf32>
    %c0_15 = arith.constant 0 : index
    %c0_16 = arith.constant 0 : index
    %20 = vector.load %arg7[%c0_15, %c0_16] : memref<1x128xf32, #tpu.memory_space<vmem>>, vector<1x128xf32>
    %21 = vector.broadcast %20 : vector<1x128xf32> to vector<16x128xf32>
    %22 = arith.addf %19, %21 : vector<16x128xf32>
    %cst_17 = arith.constant 0.000000e+00 : f32
    %23 = vector.broadcast %cst_17 : f32 to vector<16x128xf32>
    %24 = arith.maximumf %22, %23 : vector<16x128xf32>
    %25 = arith.truncf %24 : vector<16x128xf32> to vector<16x128xbf16>
    %c0_18 = arith.constant 0 : index
    %c0_19 = arith.constant 0 : index
    %26 = vector.load %arg8[%c0_18, %c0_19] : memref<128x128xbf16, #tpu.memory_space<vmem>>, vector<128x128xbf16>
    %cst_20 = arith.constant dense<0.000000e+00> : vector<16x128xf32>
    %27 = tpu.matmul %25, %26, %cst_20 {dimension_numbers = #tpu.dot_dimension_numbers<[1], [0], [0], [1], [0, 0, 1, 1], [], []>} : vector<16x128xbf16>, vector<128x128xbf16>, vector<16x128xf32> -> vector<16x128xf32>
    %c0_21 = arith.constant 0 : index
    %c0_22 = arith.constant 0 : index
    %28 = vector.load %arg9[%c0_21, %c0_22] : memref<1x128xf32, #tpu.memory_space<vmem>>, vector<1x128xf32>
    %29 = vector.broadcast %28 : vector<1x128xf32> to vector<16x128xf32>
    %30 = arith.addf %27, %29 : vector<16x128xf32>
    %31 = tpu.iota {dimensions = array<i32: 1>} : vector<16x128xi32>
    %c10_i32 = arith.constant 10 : i32
    %32 = vector.broadcast %c10_i32 : i32 to vector<16x128xi32>
    %33 = arith.cmpi slt, %31, %32 : vector<16x128xi32>
    %cst_23 = arith.constant -1.000000e+30 : f32
    %34 = vector.broadcast %cst_23 : f32 to vector<16x128xf32>
    %35 = arith.select %33, %30, %34 : vector<16x128xi1>, vector<16x128xf32>
    %cst_24 = arith.constant dense<0xFF800000> : vector<16xf32>
    %36 = vector.multi_reduction <maximumf>, %35, %cst_24 [1] : vector<16x128xf32> to vector<16xf32>
    %37 = vector.shape_cast %36 : vector<16xf32> to vector<16x1xf32>
    %38 = vector.broadcast %37 : vector<16x1xf32> to vector<16x128xf32>
    %39 = arith.subf %35, %38 : vector<16x128xf32>
    %40 = math.exp %39 : vector<16x128xf32>
    %cst_25 = arith.constant 0.000000e+00 : f32
    %41 = vector.broadcast %cst_25 : f32 to vector<16x128xf32>
    %42 = arith.select %33, %40, %41 : vector<16x128xi1>, vector<16x128xf32>
    %cst_26 = arith.constant dense<0.000000e+00> : vector<16xf32>
    %43 = vector.multi_reduction <add>, %42, %cst_26 [1] : vector<16x128xf32> to vector<16xf32>
    %44 = vector.shape_cast %43 : vector<16xf32> to vector<16x1xf32>
    %45 = math.log %44 : vector<16x1xf32>
    %46 = vector.broadcast %45 : vector<16x1xf32> to vector<16x128xf32>
    %47 = arith.subf %39, %46 : vector<16x128xf32>
    %48 = arith.truncf %47 : vector<16x128xf32> to vector<16x128xbf16>
    %c0_27 = arith.constant 0 : index
    %c0_28 = arith.constant 0 : index
    %49 = vector.load %arg10[%c0_27, %c0_28] : memref<16x128xbf16, #tpu.memory_space<vmem>>, vector<16x128xbf16>
    tpu.vector_store %arg10[%c0_27, %c0_28], %48 {strides = array<i32>} : memref<16x128xbf16, #tpu.memory_space<vmem>>, vector<16x128xbf16>,
    return
  }
  func.func @transform_0(%arg0: i32) -> (i32, i32) {
    %c0_i32 = arith.constant 0 : i32
    %c0_i32_0 = arith.constant 0 : i32
    return %arg0, %c0_i32 : i32, i32
  }
  func.func @transform_1(%arg0: i32) -> (i32, i32) {
    %c0_i32 = arith.constant 0 : i32
    %c0_i32_0 = arith.constant 0 : i32
    %c0_i32_1 = arith.constant 0 : i32
    return %c0_i32, %c0_i32_0 : i32, i32
  }
  func.func @transform_2(%arg0: i32) -> (i32, i32) {
    %c0_i32 = arith.constant 0 : i32
    %c0_i32_0 = arith.constant 0 : i32
    %c0_i32_1 = arith.constant 0 : i32
    return %c0_i32, %c0_i32_0 : i32, i32
  }
  func.func @transform_3(%arg0: i32) -> (i32, i32) {
    %c0_i32 = arith.constant 0 : i32
    %c0_i32_0 = arith.constant 0 : i32
    %c0_i32_1 = arith.constant 0 : i32
    return %c0_i32, %c0_i32_0 : i32, i32
  }
  func.func @transform_4(%arg0: i32) -> (i32, i32) {
    %c0_i32 = arith.constant 0 : i32
    %c0_i32_0 = arith.constant 0 : i32
    %c0_i32_1 = arith.constant 0 : i32
    return %c0_i32, %c0_i32_0 : i32, i32
  }
  func.func @transform_5(%arg0: i32) -> (i32, i32) {
    %c0_i32 = arith.constant 0 : i32
    %c0_i32_0 = arith.constant 0 : i32
    %c0_i32_1 = arith.constant 0 : i32
    return %c0_i32, %c0_i32_0 : i32, i32
  }
  func.func @transform_6(%arg0: i32) -> (i32, i32) {
    %c0_i32 = arith.constant 0 : i32
    %c0_i32_0 = arith.constant 0 : i32
    %c0_i32_1 = arith.constant 0 : i32
    return %c0_i32, %c0_i32_0 : i32, i32
  }
  func.func @transform_7(%arg0: i32) -> (i32, i32) {
    %c0_i32 = arith.constant 0 : i32
    %c0_i32_0 = arith.constant 0 : i32
    %c0_i32_1 = arith.constant 0 : i32
    return %c0_i32, %c0_i32_0 : i32, i32
  }
  func.func @transform_8(%arg0: i32) -> (i32, i32) {
    %c0_i32 = arith.constant 0 : i32
    %c0_i32_0 = arith.constant 0 : i32
    %c0_i32_1 = arith.constant 0 : i32
    return %c0_i32, %c0_i32_0 : i32, i32
  }
  func.func @transform_9(%arg0: i32) -> (i32, i32) {
    %c0_i32 = arith.constant 0 : i32
    %c0_i32_0 = arith.constant 0 : i32
    return %arg0, %c0_i32 : i32, i32
  }
}

</mosaic_0001>

<llo_original>
// kernel: net_forward.1
$region0: #{net_forward.1}
  #allocation0 [shape = 'u32[]', space=smem, size = 0x4, offset = 0x4, fixed_abs, tag = 'smem constant byte address 0x4 - core index']
  #allocation1 [shape = 'u32[72,128]{1,0:T(1,128)}', space=vmem, size = 0x9000, scoped, tag = 'internal scratch']
  %s0 = inlined_call_operand.vmem [shape: f32[16,128], index: 0, kind: input, shape index: {}]
  %s1 = inlined_call_operand.hbm [shape: bf16[128,128], index: 1, kind: input, shape index: {}]
  %s2 = inlined_call_operand.vmem [shape: f32[1,128], index: 2, kind: input, shape index: {}]
  %s3 = inlined_call_operand.hbm [shape: bf16[128,128], index: 3, kind: input, shape index: {}]
  %s4 = inlined_call_operand.vmem [shape: f32[1,128], index: 4, kind: input, shape index: {}]
  %s5 = inlined_call_operand.hbm [shape: bf16[128,128], index: 5, kind: input, shape index: {}]
  %s6 = inlined_call_operand.vmem [shape: f32[1,128], index: 6, kind: input, shape index: {}]
  %s7 = inlined_call_operand.hbm [shape: bf16[128,128], index: 7, kind: input, shape index: {}]
  %s8 = inlined_call_operand.vmem [shape: f32[1,128], index: 8, kind: input, shape index: {}]
  %s9 = inlined_call_operand.vmem [shape: bf16[16,128], index: 9, kind: output, shape index: {}]
  %s10 = sld [smem:[#allocation0]]
  $region62: #{net_forward.1} parent=0
    _
  %s12 = ssub.s32 1, %s10
  %s13 = scalar_select 0, %s12, %s10
  $region1: #{net_forward.1} parent=0
    #allocation2 [shape = 'u8[32768]{0}', space=vmem, size = 0x8000, scoped, tag = 'input window, operand 1, single buffered']
    #allocation3 [shape = 's32[1]{0}', space=sflag, size = 0x4, scoped, tag = 'scoped memory for net_forward.1']
    #allocation4 [shape = 'u8[32768]{0}', space=vmem, size = 0x8000, scoped, tag = 'input window, operand 3, single buffered']
    #allocation5 [shape = 's32[1]{0}', space=sflag, size = 0x4, scoped, tag = 'scoped memory for net_forward.1']
    #allocation6 [shape = 'u8[32768]{0}', space=vmem, size = 0x8000, scoped, tag = 'input window, operand 5, single buffered']
    #allocation7 [shape = 'u8[32768]{0}', space=vmem, size = 0x8000, scoped, tag = 'input window, operand 7, single buffered']
    #allocation8 [shape = 's32[1]{0}', space=sflag, size = 0x4, scoped, tag = 'scoped memory for net_forward.1']
    %14 = vsyncpa [#allocation3], 0
    %15 = vsyncpa [#allocation5], 0
    %16 = vsyncpa [#allocation8], 0
    // Predicated region
    $region2: #{net_forward.1} parent=1 // pred_check
      _
    $region3: #{net_forward.1} parent=1 // pred_check_branch
      %18 = sbr.rel (0) target = $region5
    $region4: #{net_forward.1} parent=1 // pred_region
      _
    $region5: #{net_forward.1} parent=1 // pred_fallthru
      _
    // Predicated region
    $region6: #{net_forward.1} parent=1 // pred_check
      _
    $region7: #{net_forward.1} parent=1 // pred_check_branch
      %20 = sbr.rel (0) target = $region9
    $region8: #{net_forward.1} parent=1 // pred_region
      %22 = vsyncadd [#allocation3], 0
      %s23 = sshll.u32 %s1, 4
      %s24 = int_to_ptr.hbm [resolvable:$true] %s23
      %s25 = sshll.u32 [#allocation2], 4
      %s26 = int_to_ptr.vmem [resolvable:$true] %s25
      %31 = dma.hbm_to_vmem [thread:$0]  %s24, 1024, %s26, [#allocation3], 64, 64, 4
    $region9: #{net_forward.1} parent=1 // pred_fallthru
      _
    // Predicated region
    $region10: #{net_forward.1} parent=1 // pred_check
      _
    $region11: #{net_forward.1} parent=1 // pred_check_branch
      %33 = sbr.rel (0) target = $region13
    $region12: #{net_forward.1} parent=1 // pred_region
      _
    $region13: #{net_forward.1} parent=1 // pred_fallthru
      _
    // Predicated region
    $region14: #{net_forward.1} parent=1 // pred_check
      _
    $region15: #{net_forward.1} parent=1 // pred_check_branch
      %35 = sbr.rel (0) target = $region17
    $region16: #{net_forward.1} parent=1 // pred_region
      %37 = vsyncadd [#allocation5], 0
      %s38 = sshll.u32 %s3, 4
      %s39 = int_to_ptr.hbm [resolvable:$true] %s38
      %s40 = sshll.u32 [#allocation4], 4
      %s41 = int_to_ptr.vmem [resolvable:$true] %s40
      %46 = dma.hbm_to_vmem [thread:$0]  %s39, 1024, %s41, [#allocation5], 64, 64, 4
    $region17: #{net_forward.1} parent=1 // pred_fallthru
      _
    // Predicated region
    $region18: #{net_forward.1} parent=1 // pred_check
      _
    $region19: #{net_forward.1} parent=1 // pred_check_branch
      %48 = sbr.rel (0) target = $region21
    $region20: #{net_forward.1} parent=1 // pred_region
      _
    $region21: #{net_forward.1} parent=1 // pred_fallthru
      _
    // Predicated region
    $region22: #{net_forward.1} parent=1 // pred_check
      _
    $region23: #{net_forward.1} parent=1 // pred_check_branch
      %50 = sbr.rel (0) target = $region25
    $region24: #{net_forward.1} parent=1 // pred_region
      %52 = vsyncadd [#allocation5], 0
      %s53 = sshll.u32 %s5, 4
      %s54 = int_to_ptr.hbm [resolvable:$true] %s53
      %s55 = sshll.u32 [#allocation6], 4
      %s56 = int_to_ptr.vmem [resolvable:$true] %s55
      %61 = dma.hbm_to_vmem [thread:$0]  %s54, 1024, %s56, [#allocation5], 64, 64, 4
    $region25: #{net_forward.1} parent=1 // pred_fallthru
      _
    // Predicated region
    $region26: #{net_forward.1} parent=1 // pred_check
      _
    $region27: #{net_forward.1} parent=1 // pred_check_branch
      %63 = sbr.rel (0) target = $region29
    $region28: #{net_forward.1} parent=1 // pred_region
      _
    $region29: #{net_forward.1} parent=1 // pred_fallthru
      _
    // Predicated region
    $region30: #{net_forward.1} parent=1 // pred_check
      _
    $region31: #{net_forward.1} parent=1 // pred_check_branch
      %65 = sbr.rel (0) target = $region33
    $region32: #{net_forward.1} parent=1 // pred_region
      %67 = vsyncadd [#allocation8], 0
      %s68 = sshll.u32 %s7, 4
      %s69 = int_to_ptr.hbm [resolvable:$true] %s68
      %s70 = sshll.u32 [#allocation7], 4
      %s71 = int_to_ptr.vmem [resolvable:$true] %s70
      %76 = dma.hbm_to_vmem [thread:$0]  %s69, 1024, %s71, [#allocation8], 64, 64, 4
    $region33: #{net_forward.1} parent=1 // pred_fallthru
      _
    // Predicated region
    $region34: #{net_forward.1} parent=1 // pred_check
      _
    $region35: #{net_forward.1} parent=1 // pred_check_branch
      %78 = sbr.rel (0) target = $region37
    $region36: #{net_forward.1} parent=1 // pred_region
      _
    $region37: #{net_forward.1} parent=1 // pred_fallthru
      _
    // Predicated region
    $region38: #{net_forward.1} parent=1 // pred_check
      _
    $region39: #{net_forward.1} parent=1 // pred_check_branch
      %80 = sbr.rel (0) target = $region41
    $region40: #{net_forward.1} parent=1 // pred_region
      %82 = dma.done [#allocation3], 1024
    $region41: #{net_forward.1} parent=1 // pred_fallthru
      _
    // Predicated region
    $region42: #{net_forward.1} parent=1 // pred_check
      _
    $region43: #{net_forward.1} parent=1 // pred_check_branch
      %84 = sbr.rel (0) target = $region45
    $region44: #{net_forward.1} parent=1 // pred_region
      %86 = dma.done [#allocation5], 1024
    $region45: #{net_forward.1} parent=1 // pred_fallthru
      _
    // Predicated region
    $region46: #{net_forward.1} parent=1 // pred_check
      _
    $region47: #{net_forward.1} parent=1 // pred_check_branch
      %88 = sbr.rel (0) target = $region49
    $region48: #{net_forward.1} parent=1 // pred_region
      %90 = dma.done [#allocation5], 1024
    $region49: #{net_forward.1} parent=1 // pred_fallthru
      _
    // Predicated region
    $region50: #{net_forward.1} parent=1 // pred_check
      _
    $region51: #{net_forward.1} parent=1 // pred_check_branch
      %92 = sbr.rel (0) target = $region53
    $region52: #{net_forward.1} parent=1 // pred_region
      %94 = dma.done [#allocation8], 1024
    $region53: #{net_forward.1} parent=1 // pred_fallthru
      _
    %v95 = vld [vmem:[%s0] sm:$0xff]
    %v96 = vld [vmem:[%s0 + $0x8] sm:$0xff]
    %v97 = vpack.c.bf16 %v96, %v95
    %v98 = vld [vmem:[#allocation2] sm:$0xf]
    %v99 = vld [vmem:[#allocation2 + $0x4] sm:$0xf]
    %v100 = vld [vmem:[#allocation2 + $0x8] sm:$0xf]
    %v101 = vld [vmem:[#allocation2 + $0xc] sm:$0xf]
    %v102 = vld [vmem:[#allocation2 + $0x10] sm:$0xf]
    %v103 = vld [vmem:[#allocation2 + $0x14] sm:$0xf]
    %v104 = vld [vmem:[#allocation2 + $0x18] sm:$0xf]
    %v105 = vld [vmem:[#allocation2 + $0x1c] sm:$0xf]
    %v106 = vld [vmem:[#allocation2 + $0x20] sm:$0xf]
    %v107 = vld [vmem:[#allocation2 + $0x24] sm:$0xf]
    %v108 = vld [vmem:[#allocation2 + $0x28] sm:$0xf]
    %v109 = vld [vmem:[#allocation2 + $0x2c] sm:$0xf]
    %v110 = vld [vmem:[#allocation2 + $0x30] sm:$0xf]
    %v111 = vld [vmem:[#allocation2 + $0x34] sm:$0xf]
    %v112 = vld [vmem:[#allocation2 + $0x38] sm:$0xf]
    %v113 = vld [vmem:[#allocation2 + $0x3c] sm:$0xf]
    %v114 = vld [vmem:[%s2] sm:$0x1]
    %v116 = vperm.slane %v114, 0
    %v134 = vunpack.c.l.b16 %v98
    %v135 = vunpack.c.l.b16 %v99
    %v136 = vunpack.c.l.b16 %v100
    %v137 = vunpack.c.l.b16 %v101
    %v138 = vunpack.c.l.b16 %v102
    %v139 = vunpack.c.l.b16 %v103
    %v140 = vunpack.c.l.b16 %v104
    %v141 = vunpack.c.l.b16 %v105
    %v142 = vunpack.c.l.b16 %v106
    %v143 = vunpack.c.l.b16 %v107
    %v144 = vunpack.c.l.b16 %v108
    %v145 = vunpack.c.l.b16 %v109
    %v146 = vunpack.c.l.b16 %v110
    %v147 = vunpack.c.l.b16 %v111
    %v148 = vunpack.c.l.b16 %v112
    %v149 = vunpack.c.l.b16 %v113
    %v150 = vpack.c.b16 %v135, %v134
    %v151 = vpack.c.b16 %v137, %v136
    %v152 = vpack.c.b16 %v139, %v138
    %v153 = vpack.c.b16 %v141, %v140
    %v154 = vpack.c.b16 %v143, %v142
    %v155 = vpack.c.b16 %v145, %v144
    %v156 = vpack.c.b16 %v147, %v146
    %v157 = vpack.c.b16 %v149, %v148
    %166 = vmatpush.bf16.msra.mxu0 %v157
    %167 = vmatpush.bf16.msra.mxu0 %v156
    %168 = vmatpush.bf16.msra.mxu0 %v155
    %169 = vmatpush.bf16.msra.mxu0 %v154
    %170 = vmatpush.bf16.msra.mxu0 %v153
    %171 = vmatpush.bf16.msra.mxu0 %v152
    %172 = vmatpush.bf16.msra.mxu0 %v151
    %173 = vmatpush.bf16.msra.mxu0 %v150
    %174 = vmatmul.bf16.gmra.mxu0 %v97
    %v175 = vpop.f32.mrf.mxu0
    %v176 = vadd.f32 %v116, %v175
    %v177 = vpop.f32.mrf.mxu0
    %v178 = vadd.f32 %v116, %v177
    %179 = vdwg.mxu0
    %v180 = vmax.f32 %v176, 0.0
    %v181 = vmax.f32 %v178, 0.0
    %v182 = vpack.c.bf16 %v181, %v180
    %v183 = vld [vmem:[#allocation4] sm:$0xf]
    %v184 = vld [vmem:[#allocation4 + $0x4] sm:$0xf]
    %v185 = vld [vmem:[#allocation4 + $0x8] sm:$0xf]
    %v186 = vld [vmem:[#allocation4 + $0xc] sm:$0xf]
    %v187 = vld [vmem:[#allocation4 + $0x10] sm:$0xf]
    %v188 = vld [vmem:[#allocation4 + $0x14] sm:$0xf]
    %v189 = vld [vmem:[#allocation4 + $0x18] sm:$0xf]
    %v190 = vld [vmem:[#allocation4 + $0x1c] sm:$0xf]
    %v191 = vld [vmem:[#allocation4 + $0x20] sm:$0xf]
    %v192 = vld [vmem:[#allocation4 + $0x24] sm:$0xf]
    %v193 = vld [vmem:[#allocation4 + $0x28] sm:$0xf]
    %v194 = vld [vmem:[#allocation4 + $0x2c] sm:$0xf]
    %v195 = vld [vmem:[#allocation4 + $0x30] sm:$0xf]
    %v196 = vld [vmem:[#allocation4 + $0x34] sm:$0xf]
    %v197 = vld [vmem:[#allocation4 + $0x38] sm:$0xf]
    %v198 = vld [vmem:[#allocation4 + $0x3c] sm:$0xf]
    %v199 = vld [vmem:[%s4] sm:$0x1]
    %v201 = vperm.slane %v199, 0
    %v219 = vunpack.c.l.b16 %v183
    %v220 = vunpack.c.l.b16 %v184
    %v221 = vunpack.c.l.b16 %v185
    %v222 = vunpack.c.l.b16 %v186
    %v223 = vunpack.c.l.b16 %v187
    %v224 = vunpack.c.l.b16 %v188
    %v225 = vunpack.c.l.b16 %v189
    %v226 = vunpack.c.l.b16 %v190
    %v227 = vunpack.c.l.b16 %v191
    %v228 = vunpack.c.l.b16 %v192
    %v229 = vunpack.c.l.b16 %v193
    %v230 = vunpack.c.l.b16 %v194
    %v231 = vunpack.c.l.b16 %v195
    %v232 = vunpack.c.l.b16 %v196
    %v233 = vunpack.c.l.b16 %v197
    %v234 = vunpack.c.l.b16 %v198
    %v235 = vpack.c.b16 %v220, %v219
    %v236 = vpack.c.b16 %v222, %v221
    %v237 = vpack.c.b16 %v224, %v223
    %v238 = vpack.c.b16 %v226, %v225
    %v239 = vpack.c.b16 %v228, %v227
    %v240 = vpack.c.b16 %v230, %v229
    %v241 = vpack.c.b16 %v232, %v231
    %v242 = vpack.c.b16 %v234, %v233
    %251 = vmatpush.bf16.msra.mxu0 %v242
    %252 = vmatpush.bf16.msra.mxu0 %v241
    %253 = vmatpush.bf16.msra.mxu0 %v240
    %254 = vmatpush.bf16.msra.mxu0 %v239
    %255 = vmatpush.bf16.msra.mxu0 %v238
    %256 = vmatpush.bf16.msra.mxu0 %v237
    %257 = vmatpush.bf16.msra.mxu0 %v236
    %258 = vmatpush.bf16.msra.mxu0 %v235
    %259 = vmatmul.bf16.gmra.mxu0 %v182
    %v260 = vpop.f32.mrf.mxu0
    %v261 = vadd.f32 %v201, %v260
    %v262 = vpop.f32.mrf.mxu0
    %v263 = vadd.f32 %v201, %v262
    %264 = vdwg.mxu0
    %v265 = vmax.f32 %v261, 0.0
    %v266 = vmax.f32 %v263, 0.0
    %v267 = vpack.c.bf16 %v266, %v265
    %v268 = vld [vmem:[#allocation6] sm:$0xf]
    %v269 = vld [vmem:[#allocation6 + $0x4] sm:$0xf]
    %v270 = vld [vmem:[#allocation6 + $0x8] sm:$0xf]
    %v271 = vld [vmem:[#allocation6 + $0xc] sm:$0xf]
    %v272 = vld [vmem:[#allocation6 + $0x10] sm:$0xf]
    %v273 = vld [vmem:[#allocation6 + $0x14] sm:$0xf]
    %v274 = vld [vmem:[#allocation6 + $0x18] sm:$0xf]
    %v275 = vld [vmem:[#allocation6 + $0x1c] sm:$0xf]
    %v276 = vld [vmem:[#allocation6 + $0x20] sm:$0xf]
    %v277 = vld [vmem:[#allocation6 + $0x24] sm:$0xf]
    %v278 = vld [vmem:[#allocation6 + $0x28] sm:$0xf]
    %v279 = vld [vmem:[#allocation6 + $0x2c] sm:$0xf]
    %v280 = vld [vmem:[#allocation6 + $0x30] sm:$0xf]
    %v281 = vld [vmem:[#allocation6 + $0x34] sm:$0xf]
    %v282 = vld [vmem:[#allocation6 + $0x38] sm:$0xf]
    %v283 = vld [vmem:[#allocation6 + $0x3c] sm:$0xf]
    %v284 = vld [vmem:[%s6] sm:$0x1]
    %v286 = vperm.slane %v284, 0
    %v304 = vunpack.c.l.b16 %v268
    %v305 = vunpack.c.l.b16 %v269
    %v306 = vunpack.c.l.b16 %v270
    %v307 = vunpack.c.l.b16 %v271
    %v308 = vunpack.c.l.b16 %v272
    %v309 = vunpack.c.l.b16 %v273
    %v310 = vunpack.c.l.b16 %v274
    %v311 = vunpack.c.l.b16 %v275
    %v312 = vunpack.c.l.b16 %v276
    %v313 = vunpack.c.l.b16 %v277
    %v314 = vunpack.c.l.b16 %v278
    %v315 = vunpack.c.l.b16 %v279
    %v316 = vunpack.c.l.b16 %v280
    %v317 = vunpack.c.l.b16 %v281
    %v318 = vunpack.c.l.b16 %v282
    %v319 = vunpack.c.l.b16 %v283
    %v320 = vpack.c.b16 %v305, %v304
    %v321 = vpack.c.b16 %v307, %v306
    %v322 = vpack.c.b16 %v309, %v308
    %v323 = vpack.c.b16 %v311, %v310
    %v324 = vpack.c.b16 %v313, %v312
    %v325 = vpack.c.b16 %v315, %v314
    %v326 = vpack.c.b16 %v317, %v316
    %v327 = vpack.c.b16 %v319, %v318
    %336 = vmatpush.bf16.msra.mxu0 %v327
    %337 = vmatpush.bf16.msra.mxu0 %v326
    %338 = vmatpush.bf16.msra.mxu0 %v325
    %339 = vmatpush.bf16.msra.mxu0 %v324
    %340 = vmatpush.bf16.msra.mxu0 %v323
    %341 = vmatpush.bf16.msra.mxu0 %v322
    %342 = vmatpush.bf16.msra.mxu0 %v321
    %343 = vmatpush.bf16.msra.mxu0 %v320
    %344 = vmatmul.bf16.gmra.mxu0 %v267
    %v345 = vpop.f32.mrf.mxu0
    %v346 = vadd.f32 %v286, %v345
    %v347 = vpop.f32.mrf.mxu0
    %v348 = vadd.f32 %v286, %v347
    %349 = vdwg.mxu0
    %v350 = vmax.f32 %v346, 0.0
    %v351 = vmax.f32 %v348, 0.0
    %v352 = vpack.c.bf16 %v351, %v350
    %v353 = vld [vmem:[#allocation7] sm:$0xf]
    %v354 = vld [vmem:[#allocation7 + $0x4] sm:$0xf]
    %v355 = vld [vmem:[#allocation7 + $0x8] sm:$0xf]
    %v356 = vld [vmem:[#allocation7 + $0xc] sm:$0xf]
    %v357 = vld [vmem:[#allocation7 + $0x10] sm:$0xf]
    %v358 = vld [vmem:[#allocation7 + $0x14] sm:$0xf]
    %v359 = vld [vmem:[#allocation7 + $0x18] sm:$0xf]
    %v360 = vld [vmem:[#allocation7 + $0x1c] sm:$0xf]
    %v361 = vld [vmem:[#allocation7 + $0x20] sm:$0xf]
    %v362 = vld [vmem:[#allocation7 + $0x24] sm:$0xf]
    %v363 = vld [vmem:[#allocation7 + $0x28] sm:$0xf]
    %v364 = vld [vmem:[#allocation7 + $0x2c] sm:$0xf]
    %v365 = vld [vmem:[#allocation7 + $0x30] sm:$0xf]
    %v366 = vld [vmem:[#allocation7 + $0x34] sm:$0xf]
    %v367 = vld [vmem:[#allocation7 + $0x38] sm:$0xf]
    %v368 = vld [vmem:[#allocation7 + $0x3c] sm:$0xf]
    %v369 = vld [vmem:[%s8] sm:$0x1]
    %v371 = vperm.slane %v369, 0
    %v389 = vunpack.c.l.b16 %v353
    %v390 = vunpack.c.l.b16 %v354
    %v391 = vunpack.c.l.b16 %v355
    %v392 = vunpack.c.l.b16 %v356
    %v393 = vunpack.c.l.b16 %v357
    %v394 = vunpack.c.l.b16 %v358
    %v395 = vunpack.c.l.b16 %v359
    %v396 = vunpack.c.l.b16 %v360
    %v397 = vunpack.c.l.b16 %v361
    %v398 = vunpack.c.l.b16 %v362
    %v399 = vunpack.c.l.b16 %v363
    %v400 = vunpack.c.l.b16 %v364
    %v401 = vunpack.c.l.b16 %v365
    %v402 = vunpack.c.l.b16 %v366
    %v403 = vunpack.c.l.b16 %v367
    %v404 = vunpack.c.l.b16 %v368
    %v405 = vpack.c.b16 %v390, %v389
    %v406 = vpack.c.b16 %v392, %v391
    %v407 = vpack.c.b16 %v394, %v393
    %v408 = vpack.c.b16 %v396, %v395
    %v409 = vpack.c.b16 %v398, %v397
    %v410 = vpack.c.b16 %v400, %v399
    %v411 = vpack.c.b16 %v402, %v401
    %v412 = vpack.c.b16 %v404, %v403
    %421 = vmatpush.bf16.msra.mxu0 %v412
    %422 = vmatpush.bf16.msra.mxu0 %v411
    %423 = vmatpush.bf16.msra.mxu0 %v410
    %424 = vmatpush.bf16.msra.mxu0 %v409
    %425 = vmatpush.bf16.msra.mxu0 %v408
    %426 = vmatpush.bf16.msra.mxu0 %v407
    %427 = vmatpush.bf16.msra.mxu0 %v406
    %428 = vmatpush.bf16.msra.mxu0 %v405
    %429 = vmatmul.bf16.gmra.mxu0 %v352
    %v430 = vpop.f32.mrf.mxu0
    %v431 = vadd.f32 %v371, %v430
    %v432 = vpop.f32.mrf.mxu0
    %v433 = vadd.f32 %v371, %v432
    %434 = vdwg.mxu0
    %v435 = vlaneseq
    %v436 = vand.u32 %v435, 127
    %vm437 = vcmp.lt.s32.totalorder %v436, 10
    %v438 = vsel %vm437, %v431, -1e+30
    %v439 = vsel %vm437, %v433, -1e+30
    %440 = vmax.xlane.f32.xlu0 %v438
    %v441 = vpop.xlane.xlu0 %440
    %442 = vmax.xlane.f32.xlu0 %v439
    %v443 = vpop.xlane.xlu0 %442
    %v444 = vsub.f32 %v438, %v441
    %v445 = vsub.f32 %v439, %v443
    %v446 = vmul.f32 %v444, 1.442695
    %v447 = vpow.pop %v446
    %v448 = vmul.f32 %v445, 1.442695
    %v449 = vpow.pop %v448
    %v450 = vsel %vm437, %v447, 0.0
    %v451 = vsel %vm437, %v449, 0.0
    %452 = vadd.xlane.f32.xlu0 %v450
    %v453 = vpop.xlane.xlu0 %452
    %454 = vadd.xlane.f32.xlu0 %v451
    %v455 = vpop.xlane.xlu0 %454
    %v456 = vlog2.pop %v453
    %v457 = vmul.f32 %v456, 0.6931472
    %v458 = vlog2.pop %v455
    %v459 = vmul.f32 %v458, 0.6931472
    %v460 = vsub.f32 %v444, %v457
    %v461 = vsub.f32 %v445, %v459
    %v462 = vpack.c.bf16 %v460, %v460
    %v463 = vpack.c.bf16 %v461, %v461
    %464 = vst [vmem:[%s9] sm:$0xf] %v462
    %465 = vst [vmem:[%s9 + $0x4] sm:$0xf] %v463
    // Predicated region
    $region54: #{net_forward.1} parent=1 // pred_check
      _
    $region55: #{net_forward.1} parent=1 // pred_check_branch
      %467 = sbr.rel (0) target = $region57
    $region56: #{net_forward.1} parent=1 // pred_region
      _
    $region57: #{net_forward.1} parent=1 // pred_fallthru
      _
    // Predicated region
    $region58: #{net_forward.1} parent=1 // pred_check
      _
    $region59: #{net_forward.1} parent=1 // pred_check_branch
      %469 = sbr.rel (0) target = $region61
    $region60: #{net_forward.1} parent=1 // pred_region
      _
    $region61: #{net_forward.1} parent=1 // pred_fallthru
      _
    %470 = vsyncpa [#allocation3], 1
    %471 = vsyncpa [#allocation5], 1
    %472 = vsyncpa [#allocation8], 1

</llo_original>
